<compile_context>
chip_gen: v7x
topology: tpu7x:2x2x1
jax: 0.10.0
libtpu: 0.0.40
codegen_flags: <defaults>
</compile_context>

<pallas_src>
import functools
import math

import jax
import jax.numpy as jnp
from jax.experimental import pallas as pl
from jax.experimental.pallas import tpu as pltpu


# --------------------------------------------------------------------------
# Pallas kernels
# --------------------------------------------------------------------------

def _graph_kernel(xyz_ref, dist_ref):
    """Per-batch dense pairwise distance matrix (adjacency is derived later)."""
    x = xyz_ref[0]                                             # [N, 3]
    sq = jnp.sum(x * x, axis=-1, keepdims=True)                # [N, 1]
    d2 = sq + sq.T - 2.0 * jnp.dot(x, x.T, preferred_element_type=jnp.float32)
    dist_ref[0] = jnp.sqrt(jnp.maximum(d2, 0.0))               # [N, N]


def _neighbor_mask(dist, radius):
    n = dist.shape[0]
    ii = jax.lax.broadcasted_iota(jnp.int32, (n, n), 0)
    jj = jax.lax.broadcasted_iota(jnp.int32, (n, n), 1)
    return (dist <= radius) & (ii != jj)                       # bool [N, N]


def _layer_kernel(num_heads, radius, eps,
                  feats_ref, dist_ref, wqkv_ref, bqkv_ref, wpa_ref, wps_ref,
                  bp_ref, g_ref, b_ref, o_ref):
    """Fused AttentionBlockSE3 + NormSE3 for one batch element.

    wqkv_ref : [3H, C_in, dk]  head-major stacked Q/K/V weights
    bqkv_ref : [3H, 1, dk]
    wpa_ref  : [H, dk, C_hid]  skip-cat projection rows acting on attention out
    wps_ref  : [C_in, C_hid]   skip-cat projection rows acting on input feats
    """
    x = feats_ref[0]                                           # [N, C_in] f32
    dist = dist_ref[0]                                         # [N, N]
    h = num_heads
    h3, c_in, dk = wqkv_ref.shape
    n = x.shape[0]

    adj = _neighbor_mask(dist, radius)                         # bool [N, N]
    adj_f = adj.astype(jnp.float32)

    # ---- head-batched QKV projection (bf16 matmul, f32 accumulate) --------
    x_bf = x.astype(jnp.bfloat16)
    xb = jnp.broadcast_to(x_bf[None], (h3, n, c_in))           # [3H, N, C_in]
    qkv = jnp.einsum("hnc,hcd->hnd", xb, wqkv_ref[...].astype(jnp.bfloat16),
                     preferred_element_type=jnp.float32)       # [3H, N, dk]
    qkv = qkv + bqkv_ref[...]
    q = qkv[:h]                                                # [H, N, dk]
    k = qkv[h:2 * h]
    v = qkv[2 * h:]

    # ---- masked multi-head attention (softmax over neighbours) ------------
    scale = 1.0 / math.sqrt(dk)
    logits = jnp.einsum("hnd,hmd->hnm",
                        q.astype(jnp.bfloat16), k.astype(jnp.bfloat16),
                        preferred_element_type=jnp.float32) * scale   # [H,N,N]
    logits = jnp.where(adj[None], logits, jnp.float32(-1e30))
    m = jnp.max(logits, axis=-1, keepdims=True)
    e = jnp.exp(logits - m) * adj_f[None]                      # zero when masked
    s = jnp.sum(e, axis=-1, keepdims=True)
    attn = e / jnp.maximum(s, 1e-9)                            # isolated nodes -> 0
    ov = jnp.einsum("hnm,hmd->hnd",
                    attn.astype(jnp.bfloat16), v.astype(jnp.bfloat16),
                    preferred_element_type=jnp.float32)        # [H, N, dk]

    # ---- skip-cat projection: cat([attn, x]) @ wproj == Σ_h ov_h@wpa_h + x@wps
    proj_h = jnp.einsum("hnd,hdc->hnc",
                        ov.astype(jnp.bfloat16), wpa_ref[...].astype(jnp.bfloat16),
                        preferred_element_type=jnp.float32)    # [H, N, C_hid]
    proj = (jnp.sum(proj_h, axis=0)
            + jnp.dot(x_bf, wps_ref[...].astype(jnp.bfloat16),
                      preferred_element_type=jnp.float32)
            + bp_ref[...])                                     # [N, C_hid]

    # ---- NormSE3 (degree-0): layer-norm + ReLU on norms, re-apply phase ----
    nrm = jnp.abs(proj)
    mu = jnp.mean(nrm, axis=-1, keepdims=True)
    var = jnp.mean((nrm - mu) ** 2, axis=-1, keepdims=True)
    ln = (nrm - mu) * jax.lax.rsqrt(var + eps) * g_ref[...] + b_ref[...]
    new_n = jnp.maximum(ln, 0.0)
    phase = proj / jnp.maximum(nrm, eps)
    o_ref[0] = phase * new_n


def _conv_kernel(radius, radial_hidden,
                 feat_ref, dist_ref, w_edge_ref, w_self_ref,
                 r_w1_ref, r_b1_ref, r_w2_ref, r_b2_ref, o_ref):
    """Final ConvSE3 (degree 0 -> degree 0, self_interaction=True).

    Radial MLP is unrolled over its hidden width; its scalars live in SMEM, so
    the per-edge radial weight stays a lane-dense [N, N] f32 array (no [N,N,R]
    temp)."""
    feat = feat_ref[0]                                         # [N, C]
    dist = dist_ref[0]                                         # [N, N]
    adj = _neighbor_mask(dist, radius).astype(jnp.float32)     # [N, N]

    rad = jnp.zeros_like(dist)
    for r in range(radial_hidden):                             # unrolled (R small)
        rad = rad + jnp.maximum(dist * r_w1_ref[r] + r_b1_ref[r], 0.0) * r_w2_ref[r]
    rad = rad + r_b2_ref[0]

    feat_bf = feat.astype(jnp.bfloat16)
    msg = jnp.dot(feat_bf, w_edge_ref[...].astype(jnp.bfloat16),
                  preferred_element_type=jnp.float32)          # [N, c_out]
    agg = jnp.dot((adj * rad).astype(jnp.bfloat16), msg.astype(jnp.bfloat16),
                  preferred_element_type=jnp.float32)
    o_ref[0] = agg + jnp.dot(feat_bf, w_self_ref[...].astype(jnp.bfloat16),
                             preferred_element_type=jnp.float32)


# --------------------------------------------------------------------------
# pallas_call wrappers
# --------------------------------------------------------------------------

def build_graph_pallas(xyz):
    B, N, _ = xyz.shape
    return pl.pallas_call(
        _graph_kernel,
        out_shape=jax.ShapeDtypeStruct((B, N, N), jnp.float32),
        grid=(B,),
        in_specs=[pl.BlockSpec((1, N, 3), lambda b: (b, 0, 0))],
        out_specs=pl.BlockSpec((1, N, N), lambda b: (b, 0, 0)),
        compiler_params=pltpu.CompilerParams(dimension_semantics=("parallel",)),
    )(xyz)


def attention_layer_pallas(feats, dist, wqkv_h, bqkv_h, wpa_h, wps, bproj,
                           gamma, beta, *, num_heads, radius, eps=1e-5):
    B, N, C_in = feats.shape
    H3, _, dk = wqkv_h.shape
    C_hid = wps.shape[1]
    kernel = functools.partial(_layer_kernel, num_heads, float(radius), float(eps))
    return pl.pallas_call(
        kernel,
        out_shape=jax.ShapeDtypeStruct((B, N, C_hid), jnp.float32),
        grid=(B,),
        in_specs=[
            pl.BlockSpec((1, N, C_in), lambda b: (b, 0, 0)),
            pl.BlockSpec((1, N, N), lambda b: (b, 0, 0)),
            pl.BlockSpec((H3, C_in, dk), lambda b: (0, 0, 0)),
            pl.BlockSpec((H3, 1, dk), lambda b: (0, 0, 0)),
            pl.BlockSpec((num_heads, dk, C_hid), lambda b: (0, 0, 0)),
            pl.BlockSpec((C_in, C_hid), lambda b: (0, 0)),
            pl.BlockSpec((1, C_hid), lambda b: (0, 0)),
            pl.BlockSpec((1, C_hid), lambda b: (0, 0)),
            pl.BlockSpec((1, C_hid), lambda b: (0, 0)),
        ],
        out_specs=pl.BlockSpec((1, N, C_hid), lambda b: (b, 0, 0)),
        compiler_params=pltpu.CompilerParams(dimension_semantics=("parallel",)),
    )(feats, dist, wqkv_h, bqkv_h, wpa_h, wps,
      bproj.reshape(1, -1), gamma, beta)


def conv_se3_pallas(feats, dist, fp, radius):
    B, N, C = feats.shape
    c_out = fp["w_edge"].shape[1]
    R = fp["r_w1"].shape[1]
    kernel = functools.partial(_conv_kernel, float(radius), int(R))
    return pl.pallas_call(
        kernel,
        out_shape=jax.ShapeDtypeStruct((B, N, c_out), jnp.float32),
        grid=(B,),
        in_specs=[
            pl.BlockSpec((1, N, C), lambda b: (b, 0, 0)),
            pl.BlockSpec((1, N, N), lambda b: (b, 0, 0)),
            pl.BlockSpec((C, c_out), lambda b: (0, 0)),
            pl.BlockSpec((C, c_out), lambda b: (0, 0)),
            pl.BlockSpec(memory_space=pltpu.MemorySpace.SMEM),
            pl.BlockSpec(memory_space=pltpu.MemorySpace.SMEM),
            pl.BlockSpec(memory_space=pltpu.MemorySpace.SMEM),
            pl.BlockSpec(memory_space=pltpu.MemorySpace.SMEM),
        ],
        out_specs=pl.BlockSpec((1, N, c_out), lambda b: (b, 0, 0)),
        compiler_params=pltpu.CompilerParams(dimension_semantics=("parallel",)),
    )(feats, dist, fp["w_edge"], fp["w_self"],
      fp["r_w1"].reshape(-1), fp["r_b1"].reshape(-1),
      fp["r_w2"].reshape(-1), fp["r_b2"].reshape(-1))


# --------------------------------------------------------------------------
# Parameters + forward (glue in plain JAX)
# --------------------------------------------------------------------------

def _dense_init(key, shape, scale):
    return jax.random.normal(key, shape, jnp.float32) * scale


def init_params(key, c_in, num_channels, num_heads, channels_div, c_out,
                num_layers, radial_hidden=8):
    assert num_channels % channels_div == 0
    kv = num_channels // channels_div          # key/value channels
    assert kv % num_heads == 0
    keys = iter(jax.random.split(key, num_layers * 4 + 4))
    layers = []
    in_dim = c_in
    for _ in range(num_layers):
        layers.append(dict(
            wq=_dense_init(next(keys), (in_dim, kv), 1.0 / math.sqrt(in_dim)),
            bq=jnp.zeros((kv,), jnp.float32),
            wk=_dense_init(next(keys), (in_dim, kv), 1.0 / math.sqrt(in_dim)),
            bk=jnp.zeros((kv,), jnp.float32),
            wv=_dense_init(next(keys), (in_dim, kv), 1.0 / math.sqrt(in_dim)),
            bv=jnp.zeros((kv,), jnp.float32),
            wproj=_dense_init(next(keys), (kv + in_dim, num_channels),
                              1.0 / math.sqrt(kv + in_dim)),
            bproj=jnp.zeros((num_channels,), jnp.float32),
            gamma=jnp.ones((1, num_channels), jnp.float32),
            beta=jnp.zeros((1, num_channels), jnp.float32),
        ))
        in_dim = num_channels
    final = dict(
        w_edge=_dense_init(next(keys), (in_dim, c_out), 1.0 / math.sqrt(in_dim)),
        w_self=_dense_init(next(keys), (in_dim, c_out), 1.0 / math.sqrt(in_dim)),
        r_w1=_dense_init(next(keys), (1, radial_hidden), 1.0),
        r_b1=jnp.zeros((1, radial_hidden), jnp.float32),
        r_w2=_dense_init(next(keys), (radial_hidden, 1),
                         1.0 / math.sqrt(radial_hidden)),
        r_b2=jnp.ones((1, 1), jnp.float32),
    )
    return dict(layers=layers, final=final)


def _prep_layer_weights(lp, num_heads):
    """Host-side restructuring so the fused kernel only does batched matmuls:
    Q/K/V weights become head-major [3H, C_in, dk]; the skip-cat projection is
    split into an attention part [H, dk, C_hid] and a skip part [C_in, C_hid]."""
    c_in, kv = lp["wq"].shape
    dk = kv // num_heads

    def heads(w):                                   # [C_in, kv] -> [H, C_in, dk]
        return w.reshape(c_in, num_heads, dk).transpose(1, 0, 2)

    def bheads(b):                                  # [kv] -> [H, 1, dk]
        return b.reshape(num_heads, 1, dk)

    wqkv_h = jnp.concatenate([heads(lp["wq"]), heads(lp["wk"]), heads(lp["wv"])],
                             axis=0)                # [3H, C_in, dk]
    bqkv_h = jnp.concatenate([bheads(lp["bq"]), bheads(lp["bk"]), bheads(lp["bv"])],
                             axis=0)                # [3H, 1, dk]
    wpa_h = lp["wproj"][:kv].reshape(num_heads, dk, -1)   # [H, dk, C_hid]
    wps = lp["wproj"][kv:]                                # [C_in, C_hid]
    return wqkv_h, bqkv_h, wpa_h, wps


def equivariant_net_forward(params, xyz, feature, radius, num_heads):
    B, N, _ = feature.shape
    dist = build_graph_pallas(xyz)                   # [B, N, N] (mask derived in-kernel)
    feats = feature
    for lp in params["layers"]:
        wqkv_h, bqkv_h, wpa_h, wps = _prep_layer_weights(lp, num_heads)
        feats = attention_layer_pallas(
            feats, dist, wqkv_h, bqkv_h, wpa_h, wps,
            lp["bproj"], lp["gamma"], lp["beta"],
            num_heads=num_heads, radius=radius)      # [B, N, num_channels]
    out = conv_se3_pallas(feats, dist, params["final"], radius)   # [B, N, c_out]

    # mimic the PyTorch epilogue: flatten degree-0 fiber, split per point cloud
    node_feats = {"0": out[..., None]}
    reshaped_output = [out[i] for i in range(B)]
    graph_out = dict(batch_graph=dict(dist=dist, radius=radius),
                     node_feats=node_feats, edge_feats=None,
                     pcds=[xyz[i] for i in range(B)], raw_node_feats=feature)
    return graph_out, None, reshaped_output


# --------------------------------------------------------------------------

if __name__ == "__main__":
    key = jax.random.PRNGKey(0)
    k_xyz, k_feat, k_param = jax.random.split(key, 3)

    B, N, C_IN = 2, 16, 4
    NUM_CHANNELS, NUM_HEADS, CH_DIV = 32, 4, 2
    C_OUT, NUM_LAYERS = 8, 2
    RADIUS = 0.02        # module default radius_threshold

    # points packed into a small cube so the 0.02 radius graph is non-trivial
    xyz = jax.random.uniform(k_xyz, (B, N, 3), jnp.float32) * 0.05
    feature = jax.random.normal(k_feat, (B, N, C_IN), jnp.float32)

    params = init_params(k_param, C_IN, NUM_CHANNELS, NUM_HEADS, CH_DIV,
                         C_OUT, NUM_LAYERS)

    graph_out, basis, reshaped = equivariant_net_forward(
        params, xyz, feature, RADIUS, NUM_HEADS)
    reshaped = jax.block_until_ready(reshaped)

    assert len(reshaped) == B
    for o in reshaped:
        assert o.shape == (N, C_OUT)          # fiber_out.num_features == C_OUT
        assert bool(jnp.all(jnp.isfinite(o)))
    print("KERNEL_OK")
</pallas_src>

<mosaic_0001>
module attributes {stable_mosaic.version = 11 : i64} {
  func.func @_graph_kernel(%arg0: i32, %arg1: memref<1x16x3xf32, #tpu.memory_space<vmem>>, %arg2: memref<1x16x16xf32, #tpu.memory_space<vmem>>) attributes {dimension_semantics = [#tpu.dimension_semantics<parallel>], iteration_bounds = array<i64: 2>, scalar_prefetch = 0 : i64, scratch_operands = 0 : i64, tpu.core_type = #tpu.core_type<tc>, window_params = [{transform_indices = @transform_0, window_bounds = array<i64: 1, 16, 3>}, {transform_indices = @transform_1, window_bounds = array<i64: 1, 16, 16>}]} {
    %c0 = arith.constant 0 : index
    %c0_0 = arith.constant 0 : index
    %c0_1 = arith.constant 0 : index
    %0 = vector.load %arg1[%c0, %c0_0, %c0_1] : memref<1x16x3xf32, #tpu.memory_space<vmem>>, vector<1x16x3xf32>
    %1 = vector.shape_cast %0 : vector<1x16x3xf32> to vector<16x3xf32>
    %2 = arith.mulf %1, %1 : vector<16x3xf32>
    %cst = arith.constant dense<0.000000e+00> : vector<16xf32>
    %3 = vector.multi_reduction <add>, %2, %cst [1] : vector<16x3xf32> to vector<16xf32>
    %4 = vector.shape_cast %3 : vector<16xf32> to vector<16x1xf32>
    %5 = tpu.transpose %4, [1, 0] : vector<16x1xf32> -> vector<1x16xf32>
    %6 = vector.broadcast %4 : vector<16x1xf32> to vector<16x16xf32>
    %7 = vector.broadcast %5 : vector<1x16xf32> to vector<16x16xf32>
    %8 = arith.addf %6, %7 : vector<16x16xf32>
    %9 = tpu.transpose %1, [1, 0] : vector<16x3xf32> -> vector<3x16xf32>
    %cst_2 = arith.constant dense<0.000000e+00> : vector<16x16xf32>
    %10 = tpu.matmul %1, %9, %cst_2 {dimension_numbers = #tpu.dot_dimension_numbers<[1], [0], [0], [1], [0, 0, 1, 1], [], []>} : vector<16x3xf32>, vector<3x16xf32>, vector<16x16xf32> -> vector<16x16xf32>
    %cst_3 = arith.constant 2.000000e+00 : f32
    %11 = vector.broadcast %cst_3 : f32 to vector<16x16xf32>
    %12 = arith.mulf %11, %10 : vector<16x16xf32>
    %13 = arith.subf %8, %12 : vector<16x16xf32>
    %cst_4 = arith.constant 0.000000e+00 : f32
    %14 = vector.broadcast %cst_4 : f32 to vector<16x16xf32>
    %15 = arith.maximumf %13, %14 : vector<16x16xf32>
    %16 = math.sqrt %15 : vector<16x16xf32>
    %c0_5 = arith.constant 0 : index
    %c0_6 = arith.constant 0 : index
    %c0_7 = arith.constant 0 : index
    %17 = vector.load %arg2[%c0_5, %c0_6, %c0_7] : memref<1x16x16xf32, #tpu.memory_space<vmem>>, vector<1x16x16xf32>
    %18 = vector.shape_cast %17 : vector<1x16x16xf32> to vector<16x16xf32>
    %19 = vector.shape_cast %16 : vector<16x16xf32> to vector<1x16x16xf32>
    tpu.vector_store %arg2[%c0_5, %c0_6, %c0_7], %19 {strides = array<i32>} : memref<1x16x16xf32, #tpu.memory_space<vmem>>, vector<1x16x16xf32>,
    return
  }
  func.func @transform_0(%arg0: i32) -> (i32, i32, i32) {
    %c0_i32 = arith.constant 0 : i32
    %c0_i32_0 = arith.constant 0 : i32
    %c0_i32_1 = arith.constant 0 : i32
    return %arg0, %c0_i32, %c0_i32_0 : i32, i32, i32
  }
  func.func @transform_1(%arg0: i32) -> (i32, i32, i32) {
    %c0_i32 = arith.constant 0 : i32
    %c0_i32_0 = arith.constant 0 : i32
    %c0_i32_1 = arith.constant 0 : i32
    return %arg0, %c0_i32, %c0_i32_0 : i32, i32, i32
  }
}

</mosaic_0001>

<llo_original>
// kernel: tpu_custom_call.1
$region0: #{tpu_custom_call.1}
  #allocation0 [shape = 'u32[]', space=smem, size = 0x4, offset = 0x4, fixed_abs, tag = 'smem constant byte address 0x4 - core index']
  #allocation1 [shape = 'u32[144,128]{1,0:T(1,128)}', space=vmem, size = 0x12000, scoped, tag = 'internal scratch']
  %s0 = inlined_call_operand.vmem [shape: f32[2,16,3], index: 0, kind: input, shape index: {}]
  %s1 = inlined_call_operand.hbm [shape: f32[2,16,16], index: 1, kind: output, shape index: {}]
  %s2 = sld [smem:[#allocation0]]
  $region37: #{tpu_custom_call.1} parent=0
    _
  %s4 = ssub.s32 1, %s2
  %s5 = scalar_select 0, %s4, %s2
  $region1: #{tpu_custom_call.1} parent=0
    #allocation2 [shape = 'u8[16384]{0}', space=vmem, size = 0x4000, scoped, tag = 'output window, operand 0']
    #allocation3 [shape = 's32[2]{0}', space=sflag, size = 0x8, scoped, tag = 'scoped memory for tpu_custom_call.1']
    %6 = vsyncpa [#allocation3], 0
    %s7 = scalar_lea.sflag [#allocation3], 1
    %8 = vsyncpa %s7, 0
    loop: start=0, step=1, limit=4
    $region2: #{tpu_custom_call.1} parent=1 // loop_pre_header
      _
    $region3: #{tpu_custom_call.1} parent=1 // loop_header
      %s10 = sphi 0, %s14
      %p11 = scmp.ge.s32.totalorder %s10, 4
      %s20 = sphi 0, %s22
      %s23 = sphi 0, %s20
      %s24 = sphi 0, %s23
      %s40 = sphi 0, %s24
      %s46 = sphi 0, %s48
      %s49 = sphi 0, %s46
      %s50 = sphi 0, %s49
      %s66 = sphi 0, %s50
    $region4: #{tpu_custom_call.1} parent=1 // loop_header_branch
      %13 = sbr.rel (%p11) target = $region8
    $region5: #{tpu_custom_call.1} parent=1 // loop_body
      %s15 = ssub.s32 %s10, 1
      %s16 = ssub.s32 %s10, 2
      %s17 = sadd.s32 %s10, 1
      %s18 = ssub.s32 %s10, %s17
      %p19 = scmp.eq.s32.totalorder %s18, 0
      %s21 = sadd.s32 %s20, 1
      %s22 = scalar_select %p19, %s20, %s21
      %p25 = pneg %p19
      %p26 = scmp.eq.s32.totalorder %s10, 1
      %p27 = por %p25, %p26
      %p28 = scmp.ne.s32.totalorder %s20, %s23
      %p29 = scmp.eq.s32.totalorder %s10, 0
      %p30 = por %p28, %p29
      %p31 = scmp.ne.s32.totalorder %s20, %s23
      %p32 = scmp.eq.s32.totalorder %s15, 1
      %p33 = por %p31, %p32
      %p34 = scmp.ne.s32.totalorder %s23, %s24
      %p35 = scmp.eq.s32.totalorder %s15, 0
      %p36 = por %p34, %p35
      %p37 = scmp.ne.s32.totalorder %s23, %s24
      %p38 = scmp.eq.s32.totalorder %s16, 1
      %p39 = por %p37, %p38
      %p41 = scmp.ne.s32.totalorder %s24, %s40
      %p42 = scmp.eq.s32.totalorder %s16, 0
      %p43 = por %p41, %p42
      %s44 = ssub.s32 %s10, %s17
      %p45 = scmp.eq.s32.totalorder %s44, 0
      %s47 = sadd.s32 %s46, 1
      %s48 = scalar_select %p45, %s46, %s47
      %p51 = pneg %p45
      %p52 = scmp.eq.s32.totalorder %s10, 1
      %p53 = por %p51, %p52
      %p54 = scmp.ne.s32.totalorder %s46, %s49
      %p55 = scmp.eq.s32.totalorder %s10, 0
      %p56 = por %p54, %p55
      %p57 = scmp.ne.s32.totalorder %s46, %s49
      %p58 = scmp.eq.s32.totalorder %s15, 1
      %p59 = por %p57, %p58
      %p60 = scmp.ne.s32.totalorder %s49, %s50
      %p61 = scmp.eq.s32.totalorder %s15, 0
      %p62 = por %p60, %p61
      %p63 = scmp.ne.s32.totalorder %s49, %s50
      %p64 = scmp.eq.s32.totalorder %s16, 1
      %p65 = por %p63, %p64
      %p67 = scmp.ne.s32.totalorder %s50, %s66
      %p68 = scmp.eq.s32.totalorder %s16, 0
      %p69 = por %p67, %p68
      %p70 = scmp.le.s32.totalorder 1, %s10
      %p71 = scmp.lt.s32.totalorder %s10, 3
      %p72 = pnand %p70, %p71
      %p73 = pneg %p72
      // Predicated region
      $region9: #{tpu_custom_call.1} parent=5 // pred_check
        _
      $region10: #{tpu_custom_call.1} parent=5 // pred_check_branch
        %75 = sbr.rel (%p72) target = $region12
      $region11: #{tpu_custom_call.1} parent=5 // pred_region
        %s76 = ssub.s32 %s10, 1
      $region12: #{tpu_custom_call.1} parent=5 // pred_fallthru
        _
      %p77 = scmp.lt.s32.totalorder %s10, 2
      // Predicated region
      $region13: #{tpu_custom_call.1} parent=5 // pred_check
        %p78 = pneg %p77
      $region14: #{tpu_custom_call.1} parent=5 // pred_check_branch
        %80 = sbr.rel (%p78) target = $region16
      $region15: #{tpu_custom_call.1} parent=5 // pred_region
        // Predicated region
        $region17: #{tpu_custom_call.1} parent=15 // pred_check
          %p81 = pneg %p30
        $region18: #{tpu_custom_call.1} parent=15 // pred_check_branch
          %83 = sbr.rel (%p81) target = $region20
        $region19: #{tpu_custom_call.1} parent=15 // pred_region
          %p84 = scmp.lt.s32.totalorder %s10, 1
          %s85 = scalar_select %p84, %s10, 1
          %s86 = smul.addr %s85, 2
          %s87 = smul.addr %s86, 8
          %s88 = scalar_lea.vmem %s0, %s87
        $region20: #{tpu_custom_call.1} parent=15 // pred_fallthru
          _
      $region16: #{tpu_custom_call.1} parent=5 // pred_fallthru
        _
      %p89 = scmp.le.s32.totalorder 1, %s10
      %p90 = scmp.lt.s32.totalorder %s10, 3
      %p91 = pnand %p89, %p90
      %p92 = pneg %p91
      // Predicated region
      $region21: #{tpu_custom_call.1} parent=5 // pred_check
        _
      $region22: #{tpu_custom_call.1} parent=5 // pred_check_branch
        %94 = sbr.rel (%p91) target = $region24
      $region23: #{tpu_custom_call.1} parent=5 // pred_region
        %s95 = ssub.s32 %s10, 1
        %p96 = scmp.lt.s32.totalorder %s15, 1
        %s97 = scalar_select %p96, %s15, 1
        %s98 = smul.addr %s97, 2
        %s99 = smul.addr %s98, 8
        %s100 = scalar_lea.vmem %s0, %s99
        %p101 = pneg %p36
        %p102 = pneg %p33
        %p103 = pneg %p62
        %p104 = pneg %p59
        %s105 = sand.u32 %s49, 1
        %s106 = scalar_lea.sflag [#allocation3], %s105
        %s107 = sand.u32 %s49, 1
        %s108 = smul.addr %s107, 16
        %s109 = scalar_lea.vmem [#allocation2], %s108
        %p110 = scmp.lt.s32.totalorder %s15, 1
        %s111 = scalar_select %p110, %s15, 1
        %s112 = smul.addr %s111, 2
        %s113 = smul.addr %s112, 8
        %s114 = scalar_lea.vmem %s0, %s113
        %v115 = vld [vmem:[%s114] sm:$0xff]
        %v116 = vld [vmem:[%s114 + $0x8] sm:$0xff]
        %v117 = vmul.f32 %v115, %v115
        %v118 = vmul.f32 %v116, %v116
        %vm119 = vcmask 23552
        %v120 = vsel %vm119, %v117, 0.0
        %121 = vadd.xlane.f32.xlu0 %v120
        %v122 = vpop.xlane.xlu0 %121
        %v123 = vsel %vm119, %v118, 0.0
        %124 = vadd.xlane.f32.xlu0 %v123
        %v125 = vpop.xlane.xlu0 %124
        %126 = vxpose.xlu0.b32.start [1/16] %v122, 128
        %127 = vxpose.xlu0.b32.cont [2/16] %v125, 128
        %128 = vxpose.xlu0.b32.cont [3/16] 0.0, 128
        %129 = vxpose.xlu0.b32.cont [4/16] 0.0, 128
        %130 = vxpose.xlu0.b32.cont [5/16] 0.0, 128
        %131 = vxpose.xlu0.b32.cont [6/16] 0.0, 128
        %132 = vxpose.xlu0.b32.cont [7/16] 0.0, 128
        %133 = vxpose.xlu0.b32.cont [8/16] 0.0, 128
        %134 = vxpose.xlu0.b32.cont [9/16] 0.0, 128
        %135 = vxpose.xlu0.b32.cont [10/16] 0.0, 128
        %136 = vxpose.xlu0.b32.cont [11/16] 0.0, 128
        %137 = vxpose.xlu0.b32.cont [12/16] 0.0, 128
        %138 = vxpose.xlu0.b32.cont [13/16] 0.0, 128
        %139 = vxpose.xlu0.b32.cont [14/16] 0.0, 128
        %140 = vxpose.xlu0.b32.cont [15/16] 0.0, 128
        %141 = vxpose.xlu0.b32.end [16/16] 0.0, 128
        %v142 = vpop.trf.xlu0
        %v143 = vpop.trf.xlu0
        %v144 = vpop.trf.xlu0
        %v145 = vpop.trf.xlu0
        %v146 = vpop.trf.xlu0
        %v147 = vpop.trf.xlu0
        %v148 = vpop.trf.xlu0
        %v149 = vpop.trf.xlu0
        %v150 = vpop.trf.xlu0
        %v151 = vpop.trf.xlu0
        %v152 = vpop.trf.xlu0
        %v153 = vpop.trf.xlu0
        %v154 = vpop.trf.xlu0
        %v155 = vpop.trf.xlu0
        %v156 = vpop.trf.xlu0
        %v157 = vpop.trf.xlu0
        %v158 = vlaneseq
        %v159 = vshrl.u32 %v158, 7
        %v160 = vsub.s32 0, %v159
        %v161 = vrot.slane %v142, %v160
        %v162 = vadd.f32 %v122, %v161
        %v163 = vadd.f32 %v125, %v161
        %v165 = vsel %vm119, %v115, 0
        %v168 = vsel %vm119, %v116, 0
        %170 = vmatprep.subr.mxu0 0.0
        %171 = vmatpush1.xpose.msra.mxu0 %v165
        %172 = vmatprep.subr.mxu0 0.0
        %173 = vmatpush1.xpose.msra.mxu0 %v168
        %174 = vmatprep.subr.mxu0 0.0
        %175 = vmatpush1.xpose.msra.mxu0 0.0
        %176 = vmatprep.subr.mxu0 0.0
        %177 = vmatpush1.xpose.msra.mxu0 0.0
        %178 = vmatprep.subr.mxu0 0.0
        %179 = vmatpush1.xpose.msra.mxu0 0.0
        %180 = vmatprep.subr.mxu0 0.0
        %181 = vmatpush1.xpose.msra.mxu0 0.0
        %182 = vmatprep.subr.mxu0 0.0
        %183 = vmatpush1.xpose.msra.mxu0 0.0
        %184 = vmatprep.subr.mxu0 0.0
        %185 = vmatpush1.xpose.msra.mxu0 0.0
        %186 = vmatprep.subr.mxu0 0.0
        %187 = vmatpush1.xpose.msra.mxu0 0.0
        %188 = vmatprep.subr.mxu0 0.0
        %189 = vmatpush1.xpose.msra.mxu0 0.0
        %190 = vmatprep.subr.mxu0 0.0
        %191 = vmatpush1.xpose.msra.mxu0 0.0
        %192 = vmatprep.subr.mxu0 0.0
        %193 = vmatpush1.xpose.msra.mxu0 0.0
        %194 = vmatprep.subr.mxu0 0.0
        %195 = vmatpush1.xpose.msra.mxu0 0.0
        %196 = vmatprep.subr.mxu0 0.0
        %197 = vmatpush1.xpose.msra.mxu0 0.0
        %198 = vmatprep.subr.mxu0 0.0
        %199 = vmatpush1.xpose.msra.mxu0 0.0
        %200 = vmatprep.subr.mxu0 0.0
        %201 = vmatpush1.xpose.msra.mxu0 0.0
        %202 = vmatprep.subr.mxu0 0.0
        %203 = vmatpush1.xpose.msra.mxu0 0.0
        %204 = vmatprep.subr.mxu0 0.0
        %205 = vmatpush1.xpose.msra.mxu0 0.0
        %206 = vmatprep.subr.mxu0 0.0
        %207 = vmatpush1.xpose.msra.mxu0 0.0
        %208 = vmatprep.subr.mxu0 0.0
        %209 = vmatpush1.xpose.msra.mxu0 0.0
        %210 = vmatprep.subr.mxu0 0.0
        %211 = vmatpush1.xpose.msra.mxu0 0.0
        %212 = vmatprep.subr.mxu0 0.0
        %213 = vmatpush1.xpose.msra.mxu0 0.0
        %214 = vmatprep.subr.mxu0 0.0
        %215 = vmatpush1.xpose.msra.mxu0 0.0
        %216 = vmatprep.subr.mxu0 0.0
        %217 = vmatpush1.xpose.msra.mxu0 0.0
        %218 = vmatprep.subr.mxu0 0.0
        %219 = vmatpush1.xpose.msra.mxu0 0.0
        %220 = vmatprep.subr.mxu0 0.0
        %221 = vmatpush1.xpose.msra.mxu0 0.0
        %222 = vmatprep.subr.mxu0 0.0
        %223 = vmatpush1.xpose.msra.mxu0 0.0
        %224 = vmatprep.subr.mxu0 0.0
        %225 = vmatpush1.xpose.msra.mxu0 0.0
        %226 = vmatprep.subr.mxu0 0.0
        %227 = vmatpush1.xpose.msra.mxu0 0.0
        %228 = vmatprep.subr.mxu0 0.0
        %229 = vmatpush1.xpose.msra.mxu0 0.0
        %230 = vmatprep.subr.mxu0 0.0
        %231 = vmatpush1.xpose.msra.mxu0 0.0
        %232 = vmatprep.subr.mxu0 0.0
        %233 = vmatpush1.xpose.msra.mxu0 0.0
        %234 = vmatprep.mubr.f32.mxu0 0.0
        %235 = vmatmul.mubr.f32.gmra.mrb[0].mxu0 %v165
        %v236 = vpop.f32.mrb[0].mxu0
        %v237 = vadd.f32 0.0, %v236
        %v238 = vpop.f32.mrb[0].mxu0
        %239 = vmatprep.mubr.f32.mxu0 0.0
        %240 = vmatmul.mubr.f32.gmra.mrb[0].mxu0 %v168
        %v241 = vpop.f32.mrb[0].mxu0
        %v242 = vadd.f32 0.0, %v241
        %v243 = vpop.f32.mrb[0].mxu0
        %244 = vdwg.mxu0
        %v245 = vmul.f32 %v237, 2.0
        %v246 = vmul.f32 %v242, 2.0
        %v247 = vsub.f32 %v162, %v245
        %v248 = vsub.f32 %v163, %v246
        %v249 = vmax.f32 %v247, 0.0
        %v250 = vmax.f32 %v248, 0.0
        %v251 = vrsqrt.pop %v249
        %v252 = vmul.f32 %v249, %v251
        %vm253 = vcmp.eq.f32.partialorder %v249, inf
        %v254 = vsel %vm253, %v249, %v252
        %vm255 = vcmp.eq.f32.partialorder %v249, 0.0
        %v256 = vand.u32 %v249, 2147483648
        %v257 = vsel %vm255, %v256, %v254
        %v258 = vrsqrt.pop %v250
        %v259 = vmul.f32 %v250, %v258
        %vm260 = vcmp.eq.f32.partialorder %v250, inf
        %v261 = vsel %vm260, %v250, %v259
        %vm262 = vcmp.eq.f32.partialorder %v250, 0.0
        %v263 = vand.u32 %v250, 2147483648
        %v264 = vsel %vm262, %v263, %v261
        %vm265 = vcmask 130048
        %266 = vst.msk [vmem:[%s109] sm:$0xff] %vm265, %v257
        %267 = vst.msk [vmem:[%s109 + $0x8] sm:$0xff] %vm265, %v264
        %s268 = sand.u32 %s49, 1
        %s269 = scalar_lea.sflag [#allocation3], %s268
        %s270 = sand.u32 %s49, 1
        %s271 = smul.addr %s270, 16
        %s272 = scalar_lea.vmem [#allocation2], %s271
        // Predicated region
        $region25: #{tpu_custom_call.1} parent=23 // pred_check
          %p273 = pneg %p59
        $region26: #{tpu_custom_call.1} parent=23 // pred_check_branch
          %275 = sbr.rel (%p273) target = $region28
        $region27: #{tpu_custom_call.1} parent=23 // pred_region
          %s277 = ssub.s32 256, 256
          %278 = vsyncadd %s269, %s277
          %s279 = smul.addr %s15, 2
          %s280 = smul.addr %s279, 128
          %s281 = scalar_lea.hbm %s1, %s280
          %s282 = sshll.u32 %s272, 4
          %s283 = int_to_ptr.vmem [resolvable:$true] %s282
          %288 = dma.vmem_to_hbm [thread:$0]  %s283, 256, %s281, %s269, 128, 128, 8
        $region28: #{tpu_custom_call.1} parent=23 // pred_fallthru
          _
      $region24: #{tpu_custom_call.1} parent=5 // pred_fallthru
        _
      %p289 = scmp.le.s32.totalorder 2, %s10
      // Predicated region
      $region29: #{tpu_custom_call.1} parent=5 // pred_check
        %p290 = pneg %p289
      $region30: #{tpu_custom_call.1} parent=5 // pred_check_branch
        %292 = sbr.rel (%p290) target = $region32
      $region31: #{tpu_custom_call.1} parent=5 // pred_region
        %s293 = ssub.s32 %s10, 2
        // Predicated region
        $region33: #{tpu_custom_call.1} parent=31 // pred_check
          %p294 = pneg %p65
        $region34: #{tpu_custom_call.1} parent=31 // pred_check_branch
          %296 = sbr.rel (%p294) target = $region36
        $region35: #{tpu_custom_call.1} parent=31 // pred_region
          %s297 = sand.u32 %s50, 1
          %s298 = scalar_lea.sflag [#allocation3], %s297
          %s299 = sand.u32 %s50, 1
          %s300 = smul.addr %s299, 16
          %s301 = scalar_lea.vmem [#allocation2], %s300
          %302 = dma.done %s298, 256
        $region36: #{tpu_custom_call.1} parent=31 // pred_fallthru
          _
      $region32: #{tpu_custom_call.1} parent=5 // pred_fallthru
        _
    $region6: #{tpu_custom_call.1} parent=1 // loop_footer
      %s14 = sadd.s32 1, %s10
    $region7: #{tpu_custom_call.1} parent=1 // loop_footer_branch
      %9 = sbr.rel target = $region3
    $region8: #{tpu_custom_call.1} parent=1 // loop_exit
      _
    %303 = vsyncpa [#allocation3], 1
    %s304 = scalar_lea.sflag [#allocation3], 1
    %305 = vsyncpa %s304, 1

</llo_original>
